<compile_context>
chip_gen: v6e
topology: v6e:2x2x1
jax: 0.10.0
libtpu: 0.0.40
codegen_flags: <defaults>
</compile_context>

<pallas_src>
import functools

import jax
import jax.numpy as jnp
from jax import lax
from jax.experimental import pallas as pl
from jax.experimental.pallas import tpu as pltpu


def _preact_block_kernel(x_ref, s1_ref, b1_ref, w1_ref, b2_ref, w2_ref,
                         o_ref, pad_ref, *, matmul_dtype=jnp.float32):
    B, H, WC = x_ref.shape
    WCo = o_ref.shape[2]
    BH = B * H

    # Zero only the two y-padding rows (cheap; redone every step so the kernel
    # is correct under megacore grid splitting — no cross-step scratch state).
    zero_row = jnp.zeros((B, 1, WC), jnp.float32)
    pad_ref[:, 0:1, :] = zero_row
    pad_ref[:, H + 1:H + 2, :] = zero_row

    # --- BN1 (folded scale/bias) + ReLU, written straight into the scratch ---
    pad_ref[:, 1:H + 1, :] = jnp.maximum(
        x_ref[...] * s1_ref[...] + b1_ref[...], 0.0)

    # --- conv1 (BN2 scale pre-folded into its output channels): 3 fused MXU
    #     matmuls, one per dy tap; the dx taps and the x-direction zero
    #     padding are folded into the block-banded weight w1_ref[dy] of shape
    #     (W*Cin, W*Cout). ---
    acc = None
    for dy in range(3):
        lhs = pad_ref[:, dy:dy + H, :].reshape(BH, WC).astype(matmul_dtype)
        d = jnp.dot(lhs, w1_ref[dy].astype(matmul_dtype),
                    preferred_element_type=jnp.float32)
        acc = d if acc is None else acc + d

    # --- BN2 bias + ReLU, back into the same scratch (Cin == Cout) ---
    pad_ref[:, 1:H + 1, :] = jnp.maximum(
        acc + b2_ref[...], 0.0).reshape(B, H, WCo)

    # --- conv2: same 3 fused matmuls ---
    acc = None
    for dy in range(3):
        lhs = pad_ref[:, dy:dy + H, :].reshape(BH, WCo).astype(matmul_dtype)
        d = jnp.dot(lhs, w2_ref[dy].astype(matmul_dtype),
                    preferred_element_type=jnp.float32)
        acc = d if acc is None else acc + d

    # --- residual add (re-read x_ref here to keep live ranges short) ---
    o_ref[...] = (acc + x_ref[...].reshape(BH, WC)).reshape(B, H, WCo)


def _fold_conv3x3_weights(w_hwio, width):
    """(3, 3, Cin, Cout) HWIO -> (3, width*Cin, width*Cout).

    For each dy tap, a block-banded matrix that applies all three dx taps
    (with zero padding in x) to a row laid out as (x, ci) -> x*Cin + ci.
    """
    mats = []
    for dy in range(3):
        m = None
        for dx in range(3):
            shift = jnp.eye(width, width, k=1 - dx, dtype=w_hwio.dtype)
            blk = jnp.kron(shift, w_hwio[dy, dx])
            m = blk if m is None else m + blk
        mats.append(m)
    return jnp.stack(mats, axis=0)


def _pick_block_batch(n, per_img_bytes, budget_bytes=4 << 20):
    """Largest B dividing n that fits the per-step VMEM budget while keeping
    the grid length >= 2 (so work still splits across 2 TensorCores)."""
    best = 1
    for b in range(1, n + 1):
        if n % b:
            continue
        if b * per_img_bytes > budget_bytes:
            break
        if n >= 2 and n // b < 2:
            continue
        best = b
    return best


def preact_basic_block_nhwc(x, s1, b1, w1, s2, b2, w2, *, block_batch=None,
                            matmul_dtype=jnp.float32):
    """x: (N, H, W, Cin) f32; s*/b*: (1, C) f32; w*: (3, 3, Cin, Cout) HWIO."""
    N, H, W, Cin = x.shape
    Cout = w1.shape[-1]
    assert Cin == Cout, "identity residual requires Cin == Cout (no downsample)"
    WC, WCo = W * Cin, W * Cout

    per_img_bytes = 4 * (H * WC + H * WCo + (H + 2) * WC)
    B = block_batch if block_batch is not None else _pick_block_batch(
        N, per_img_bytes)
    assert N % B == 0

    # Lane-dense folding: (N, H, W, C) -> (N, H, W*C) is a free reshape.
    x2 = x.reshape(N, H, WC)
    s1t = jnp.tile(jnp.reshape(s1, (-1,)), W)[None, :]
    b1t = jnp.tile(jnp.reshape(b1, (-1,)), W)[None, :]
    b2t = jnp.tile(jnp.reshape(b2, (-1,)), W)[None, :]
    # Constant-fold the BN2 scale into conv1's output channels (linear op, no
    # ReLU in between), then build the block-banded per-dy weight matrices.
    w1_scaled = w1 * jnp.reshape(s2, (1, 1, 1, Cout))
    w1f = _fold_conv3x3_weights(w1_scaled, W)   # (3, WC, WCo)
    w2f = _fold_conv3x3_weights(w2, W)          # (3, WCo, WCo)

    # Rough VMEM budget: double-buffered I/O blocks + resident weights + scratch.
    est = 4 * (2 * B * H * WC + 2 * B * H * WCo + B * (H + 2) * WC
               + 2 * (3 * WC * WCo + 2 * WC) + 2 * (3 * WCo * WCo + WCo))
    vmem_limit = int(min(64 << 20, max(32 << 20, 2 * est)))

    kernel = functools.partial(_preact_block_kernel, matmul_dtype=matmul_dtype)

    out2 = pl.pallas_call(
        kernel,
        out_shape=jax.ShapeDtypeStruct((N, H, WCo), jnp.float32),
        grid_spec=pltpu.PrefetchScalarGridSpec(
            num_scalar_prefetch=0,
            grid=(N // B,),
            in_specs=[
                pl.BlockSpec((B, H, WC), lambda n: (n, 0, 0)),
                pl.BlockSpec((1, WC), lambda n: (0, 0)),
                pl.BlockSpec((1, WC), lambda n: (0, 0)),
                pl.BlockSpec((3, WC, WCo), lambda n: (0, 0, 0)),
                pl.BlockSpec((1, WCo), lambda n: (0, 0)),
                pl.BlockSpec((3, WCo, WCo), lambda n: (0, 0, 0)),
            ],
            out_specs=pl.BlockSpec((B, H, WCo), lambda n: (n, 0, 0)),
            scratch_shapes=[pltpu.VMEM((B, H + 2, WC), jnp.float32)],
        ),
        compiler_params=pltpu.CompilerParams(
            dimension_semantics=("parallel",),
            vmem_limit_bytes=vmem_limit,
        ),
    )(x2, s1t, b1t, w1f, b2t, w2f)

    return out2.reshape(N, H, W, Cout)


def preact_basic_block(x_nchw, params, **kw):
    """PyTorch-facing wrapper: NCHW in, NCHW out."""
    x_nhwc = jnp.transpose(x_nchw, (0, 2, 3, 1))
    out_nhwc = preact_basic_block_nhwc(
        x_nhwc, params["s1"], params["b1"], params["w1"],
        params["s2"], params["b2"], params["w2"], **kw)
    return jnp.transpose(out_nhwc, (0, 3, 1, 2))


def _reference_nhwc(x, s1, b1, w1, s2, b2, w2):
    """Pure-JAX reference for correctness checking."""
    dn = ("NHWC", "HWIO", "NHWC")
    h1 = jnp.maximum(x * s1 + b1, 0.0)
    o1 = lax.conv_general_dilated(h1, w1, (1, 1), "SAME", dimension_numbers=dn,
                                  precision=lax.Precision.HIGHEST)
    h2 = jnp.maximum(o1 * s2 + b2, 0.0)
    o2 = lax.conv_general_dilated(h2, w2, (1, 1), "SAME", dimension_numbers=dn,
                                  precision=lax.Precision.HIGHEST)
    return o2 + x


def _fold_bn(gamma, beta, mean, var, eps=1e-5):
    scale = gamma / jnp.sqrt(var + eps)
    bias = beta - mean * scale
    return scale[None, :], bias[None, :]


if __name__ == "__main__":
    key = jax.random.PRNGKey(0)
    ks = jax.random.split(key, 11)

    N, C, Hs, Ws = 2, 4, 16, 16   # in_planes == out_planes == 4, stride=1

    # Input (PyTorch NCHW)
    x_nchw = jax.random.normal(ks[0], (N, C, Hs, Ws), jnp.float32)

    # BN1 / BN2 parameters (inference running stats)
    g1 = 1.0 + 0.1 * jax.random.normal(ks[1], (C,), jnp.float32)
    be1 = 0.1 * jax.random.normal(ks[2], (C,), jnp.float32)
    m1 = 0.1 * jax.random.normal(ks[3], (C,), jnp.float32)
    v1 = jnp.abs(jax.random.normal(ks[4], (C,), jnp.float32)) + 0.5
    g2 = 1.0 + 0.1 * jax.random.normal(ks[5], (C,), jnp.float32)
    be2 = 0.1 * jax.random.normal(ks[6], (C,), jnp.float32)
    m2 = 0.1 * jax.random.normal(ks[7], (C,), jnp.float32)
    v2 = jnp.abs(jax.random.normal(ks[8], (C,), jnp.float32)) + 0.5
    s1, b1 = _fold_bn(g1, be1, m1, v1)
    s2, b2 = _fold_bn(g2, be2, m2, v2)

    # Conv weights, created in PyTorch OIHW shape then moved to HWIO
    w1_oihw = 0.1 * jax.random.normal(ks[9], (C, C, 3, 3), jnp.float32)
    w2_oihw = 0.1 * jax.random.normal(ks[10], (C, C, 3, 3), jnp.float32)
    w1 = jnp.transpose(w1_oihw, (2, 3, 1, 0))   # HWIO
    w2 = jnp.transpose(w2_oihw, (2, 3, 1, 0))   # HWIO

    params = dict(s1=s1, b1=b1, w1=w1, s2=s2, b2=b2, w2=w2)

    out_nchw = preact_basic_block(x_nchw, params)
    out_nchw = jax.block_until_ready(out_nchw)

    # Correctness check against a pure-JAX reference
    x_nhwc = jnp.transpose(x_nchw, (0, 2, 3, 1))
    ref_nhwc = _reference_nhwc(x_nhwc, s1, b1, w1, s2, b2, w2)
    ref_nchw = jnp.transpose(ref_nhwc, (0, 3, 1, 2))
    assert out_nchw.shape == (N, C, Hs, Ws)
    assert jnp.allclose(out_nchw, ref_nchw, rtol=1e-3, atol=1e-3), \
        f"max err {jnp.max(jnp.abs(out_nchw - ref_nchw))}"

    print("KERNEL_OK")
</pallas_src>

<mosaic_0001>
module attributes {stable_mosaic.version = 11 : i64} {
  func.func @_preact_block_kernel(%arg0: i32, %arg1: memref<1x16x64xf32, #tpu.memory_space<vmem>>, %arg2: memref<1x64xf32, #tpu.memory_space<vmem>>, %arg3: memref<1x64xf32, #tpu.memory_space<vmem>>, %arg4: memref<3x64x64xf32, #tpu.memory_space<vmem>>, %arg5: memref<1x64xf32, #tpu.memory_space<vmem>>, %arg6: memref<3x64x64xf32, #tpu.memory_space<vmem>>, %arg7: memref<1x16x64xf32, #tpu.memory_space<vmem>>, %arg8: memref<1x18x64xf32, #tpu.memory_space<vmem>>) attributes {dimension_semantics = [#tpu.dimension_semantics<parallel>], iteration_bounds = array<i64: 2>, scalar_prefetch = 0 : i64, scratch_operands = 1 : i64, tpu.core_type = #tpu.core_type<tc>, window_params = [{transform_indices = @transform_0, window_bounds = array<i64: 1, 16, 64>}, {pipeline_mode = #tpu.pipeline_mode<synchronous>, transform_indices = @transform_1, window_bounds = array<i64: 1, 64>}, {pipeline_mode = #tpu.pipeline_mode<synchronous>, transform_indices = @transform_2, window_bounds = array<i64: 1, 64>}, {pipeline_mode = #tpu.pipeline_mode<synchronous>, transform_indices = @transform_3, window_bounds = array<i64: 3, 64, 64>}, {pipeline_mode = #tpu.pipeline_mode<synchronous>, transform_indices = @transform_4, window_bounds = array<i64: 1, 64>}, {pipeline_mode = #tpu.pipeline_mode<synchronous>, transform_indices = @transform_5, window_bounds = array<i64: 3, 64, 64>}, {transform_indices = @transform_6, window_bounds = array<i64: 1, 16, 64>}]} {
    %cst = arith.constant 0.000000e+00 : f32
    %0 = vector.broadcast %cst : f32 to vector<1x1x64xf32>
    %c0 = arith.constant 0 : index
    %c0_0 = arith.constant 0 : index
    %c0_1 = arith.constant 0 : index
    %1 = vector.load %arg8[%c0, %c0_0, %c0_1] : memref<1x18x64xf32, #tpu.memory_space<vmem>>, vector<1x1x64xf32>
    tpu.vector_store %arg8[%c0, %c0_0, %c0_1], %0 {strides = array<i32>} : memref<1x18x64xf32, #tpu.memory_space<vmem>>, vector<1x1x64xf32>,
    %c0_2 = arith.constant 0 : index
    %c17 = arith.constant 17 : index
    %c0_3 = arith.constant 0 : index
    %2 = vector.load %arg8[%c0_2, %c17, %c0_3] : memref<1x18x64xf32, #tpu.memory_space<vmem>>, vector<1x1x64xf32>
    tpu.vector_store %arg8[%c0_2, %c17, %c0_3], %0 {strides = array<i32>} : memref<1x18x64xf32, #tpu.memory_space<vmem>>, vector<1x1x64xf32>,
    %c0_4 = arith.constant 0 : index
    %c0_5 = arith.constant 0 : index
    %c0_6 = arith.constant 0 : index
    %3 = vector.load %arg1[%c0_4, %c0_5, %c0_6] : memref<1x16x64xf32, #tpu.memory_space<vmem>>, vector<1x16x64xf32>
    %c0_7 = arith.constant 0 : index
    %c0_8 = arith.constant 0 : index
    %4 = vector.load %arg2[%c0_7, %c0_8] : memref<1x64xf32, #tpu.memory_space<vmem>>, vector<1x64xf32>
    %5 = vector.shape_cast %4 : vector<1x64xf32> to vector<1x1x64xf32>
    %6 = vector.broadcast %5 : vector<1x1x64xf32> to vector<1x16x64xf32>
    %7 = arith.mulf %3, %6 : vector<1x16x64xf32>
    %c0_9 = arith.constant 0 : index
    %c0_10 = arith.constant 0 : index
    %8 = vector.load %arg3[%c0_9, %c0_10] : memref<1x64xf32, #tpu.memory_space<vmem>>, vector<1x64xf32>
    %9 = vector.shape_cast %8 : vector<1x64xf32> to vector<1x1x64xf32>
    %10 = vector.broadcast %9 : vector<1x1x64xf32> to vector<1x16x64xf32>
    %11 = arith.addf %7, %10 : vector<1x16x64xf32>
    %cst_11 = arith.constant 0.000000e+00 : f32
    %12 = vector.broadcast %cst_11 : f32 to vector<1x16x64xf32>
    %13 = arith.maximumf %11, %12 : vector<1x16x64xf32>
    %c0_12 = arith.constant 0 : index
    %c1 = arith.constant 1 : index
    %c0_13 = arith.constant 0 : index
    %14 = vector.load %arg8[%c0_12, %c1, %c0_13] : memref<1x18x64xf32, #tpu.memory_space<vmem>>, vector<1x16x64xf32>
    tpu.vector_store %arg8[%c0_12, %c1, %c0_13], %13 {strides = array<i32>} : memref<1x18x64xf32, #tpu.memory_space<vmem>>, vector<1x16x64xf32>,
    %c0_14 = arith.constant 0 : index
    %c0_15 = arith.constant 0 : index
    %c0_16 = arith.constant 0 : index
    %15 = vector.load %arg8[%c0_14, %c0_15, %c0_16] : memref<1x18x64xf32, #tpu.memory_space<vmem>>, vector<1x16x64xf32>
    %16 = vector.shape_cast %15 : vector<1x16x64xf32> to vector<16x64xf32>
    %c0_17 = arith.constant 0 : index
    %c0_18 = arith.constant 0 : index
    %c0_19 = arith.constant 0 : index
    %17 = vector.load %arg4[%c0_17, %c0_18, %c0_19] : memref<3x64x64xf32, #tpu.memory_space<vmem>>, vector<1x64x64xf32>
    %18 = vector.shape_cast %17 : vector<1x64x64xf32> to vector<64x64xf32>
    %cst_20 = arith.constant dense<0.000000e+00> : vector<16x64xf32>
    %19 = tpu.matmul %16, %18, %cst_20 {dimension_numbers = #tpu.dot_dimension_numbers<[1], [0], [0], [1], [0, 0, 1, 1], [], []>} : vector<16x64xf32>, vector<64x64xf32>, vector<16x64xf32> -> vector<16x64xf32>
    %c0_21 = arith.constant 0 : index
    %c1_22 = arith.constant 1 : index
    %c0_23 = arith.constant 0 : index
    %20 = vector.load %arg8[%c0_21, %c1_22, %c0_23] : memref<1x18x64xf32, #tpu.memory_space<vmem>>, vector<1x16x64xf32>
    %21 = vector.shape_cast %20 : vector<1x16x64xf32> to vector<16x64xf32>
    %c1_24 = arith.constant 1 : index
    %c0_25 = arith.constant 0 : index
    %c0_26 = arith.constant 0 : index
    %22 = vector.load %arg4[%c1_24, %c0_25, %c0_26] : memref<3x64x64xf32, #tpu.memory_space<vmem>>, vector<1x64x64xf32>
    %23 = vector.shape_cast %22 : vector<1x64x64xf32> to vector<64x64xf32>
    %cst_27 = arith.constant dense<0.000000e+00> : vector<16x64xf32>
    %24 = tpu.matmul %21, %23, %cst_27 {dimension_numbers = #tpu.dot_dimension_numbers<[1], [0], [0], [1], [0, 0, 1, 1], [], []>} : vector<16x64xf32>, vector<64x64xf32>, vector<16x64xf32> -> vector<16x64xf32>
    %25 = arith.addf %19, %24 : vector<16x64xf32>
    %c0_28 = arith.constant 0 : index
    %c2 = arith.constant 2 : index
    %c0_29 = arith.constant 0 : index
    %26 = vector.load %arg8[%c0_28, %c2, %c0_29] : memref<1x18x64xf32, #tpu.memory_space<vmem>>, vector<1x16x64xf32>
    %27 = vector.shape_cast %26 : vector<1x16x64xf32> to vector<16x64xf32>
    %c2_30 = arith.constant 2 : index
    %c0_31 = arith.constant 0 : index
    %c0_32 = arith.constant 0 : index
    %28 = vector.load %arg4[%c2_30, %c0_31, %c0_32] : memref<3x64x64xf32, #tpu.memory_space<vmem>>, vector<1x64x64xf32>
    %29 = vector.shape_cast %28 : vector<1x64x64xf32> to vector<64x64xf32>
    %cst_33 = arith.constant dense<0.000000e+00> : vector<16x64xf32>
    %30 = tpu.matmul %27, %29, %cst_33 {dimension_numbers = #tpu.dot_dimension_numbers<[1], [0], [0], [1], [0, 0, 1, 1], [], []>} : vector<16x64xf32>, vector<64x64xf32>, vector<16x64xf32> -> vector<16x64xf32>
    %31 = arith.addf %25, %30 : vector<16x64xf32>
    %c0_34 = arith.constant 0 : index
    %c0_35 = arith.constant 0 : index
    %32 = vector.load %arg5[%c0_34, %c0_35] : memref<1x64xf32, #tpu.memory_space<vmem>>, vector<1x64xf32>
    %33 = vector.broadcast %32 : vector<1x64xf32> to vector<16x64xf32>
    %34 = arith.addf %31, %33 : vector<16x64xf32>
    %cst_36 = arith.constant 0.000000e+00 : f32
    %35 = vector.broadcast %cst_36 : f32 to vector<16x64xf32>
    %36 = arith.maximumf %34, %35 : vector<16x64xf32>
    %37 = vector.shape_cast %36 : vector<16x64xf32> to vector<1x16x64xf32>
    %c0_37 = arith.constant 0 : index
    %c1_38 = arith.constant 1 : index
    %c0_39 = arith.constant 0 : index
    %38 = vector.load %arg8[%c0_37, %c1_38, %c0_39] : memref<1x18x64xf32, #tpu.memory_space<vmem>>, vector<1x16x64xf32>
    tpu.vector_store %arg8[%c0_37, %c1_38, %c0_39], %37 {strides = array<i32>} : memref<1x18x64xf32, #tpu.memory_space<vmem>>, vector<1x16x64xf32>,
    %c0_40 = arith.constant 0 : index
    %c0_41 = arith.constant 0 : index
    %c0_42 = arith.constant 0 : index
    %39 = vector.load %arg8[%c0_40, %c0_41, %c0_42] : memref<1x18x64xf32, #tpu.memory_space<vmem>>, vector<1x16x64xf32>
    %40 = vector.shape_cast %39 : vector<1x16x64xf32> to vector<16x64xf32>
    %c0_43 = arith.constant 0 : index
    %c0_44 = arith.constant 0 : index
    %c0_45 = arith.constant 0 : index
    %41 = vector.load %arg6[%c0_43, %c0_44, %c0_45] : memref<3x64x64xf32, #tpu.memory_space<vmem>>, vector<1x64x64xf32>
    %42 = vector.shape_cast %41 : vector<1x64x64xf32> to vector<64x64xf32>
    %cst_46 = arith.constant dense<0.000000e+00> : vector<16x64xf32>
    %43 = tpu.matmul %40, %42, %cst_46 {dimension_numbers = #tpu.dot_dimension_numbers<[1], [0], [0], [1], [0, 0, 1, 1], [], []>} : vector<16x64xf32>, vector<64x64xf32>, vector<16x64xf32> -> vector<16x64xf32>
    %c0_47 = arith.constant 0 : index
    %c1_48 = arith.constant 1 : index
    %c0_49 = arith.constant 0 : index
    %44 = vector.load %arg8[%c0_47, %c1_48, %c0_49] : memref<1x18x64xf32, #tpu.memory_space<vmem>>, vector<1x16x64xf32>
    %45 = vector.shape_cast %44 : vector<1x16x64xf32> to vector<16x64xf32>
    %c1_50 = arith.constant 1 : index
    %c0_51 = arith.constant 0 : index
    %c0_52 = arith.constant 0 : index
    %46 = vector.load %arg6[%c1_50, %c0_51, %c0_52] : memref<3x64x64xf32, #tpu.memory_space<vmem>>, vector<1x64x64xf32>
    %47 = vector.shape_cast %46 : vector<1x64x64xf32> to vector<64x64xf32>
    %cst_53 = arith.constant dense<0.000000e+00> : vector<16x64xf32>
    %48 = tpu.matmul %45, %47, %cst_53 {dimension_numbers = #tpu.dot_dimension_numbers<[1], [0], [0], [1], [0, 0, 1, 1], [], []>} : vector<16x64xf32>, vector<64x64xf32>, vector<16x64xf32> -> vector<16x64xf32>
    %49 = arith.addf %43, %48 : vector<16x64xf32>
    %c0_54 = arith.constant 0 : index
    %c2_55 = arith.constant 2 : index
    %c0_56 = arith.constant 0 : index
    %50 = vector.load %arg8[%c0_54, %c2_55, %c0_56] : memref<1x18x64xf32, #tpu.memory_space<vmem>>, vector<1x16x64xf32>
    %51 = vector.shape_cast %50 : vector<1x16x64xf32> to vector<16x64xf32>
    %c2_57 = arith.constant 2 : index
    %c0_58 = arith.constant 0 : index
    %c0_59 = arith.constant 0 : index
    %52 = vector.load %arg6[%c2_57, %c0_58, %c0_59] : memref<3x64x64xf32, #tpu.memory_space<vmem>>, vector<1x64x64xf32>
    %53 = vector.shape_cast %52 : vector<1x64x64xf32> to vector<64x64xf32>
    %cst_60 = arith.constant dense<0.000000e+00> : vector<16x64xf32>
    %54 = tpu.matmul %51, %53, %cst_60 {dimension_numbers = #tpu.dot_dimension_numbers<[1], [0], [0], [1], [0, 0, 1, 1], [], []>} : vector<16x64xf32>, vector<64x64xf32>, vector<16x64xf32> -> vector<16x64xf32>
    %55 = arith.addf %49, %54 : vector<16x64xf32>
    %c0_61 = arith.constant 0 : index
    %c0_62 = arith.constant 0 : index
    %c0_63 = arith.constant 0 : index
    %56 = vector.load %arg1[%c0_61, %c0_62, %c0_63] : memref<1x16x64xf32, #tpu.memory_space<vmem>>, vector<1x16x64xf32>
    %57 = vector.shape_cast %56 : vector<1x16x64xf32> to vector<16x64xf32>
    %58 = arith.addf %55, %57 : vector<16x64xf32>
    %59 = vector.shape_cast %58 : vector<16x64xf32> to vector<1x16x64xf32>
    %c0_64 = arith.constant 0 : index
    %c0_65 = arith.constant 0 : index
    %c0_66 = arith.constant 0 : index
    %60 = vector.load %arg7[%c0_64, %c0_65, %c0_66] : memref<1x16x64xf32, #tpu.memory_space<vmem>>, vector<1x16x64xf32>
    tpu.vector_store %arg7[%c0_64, %c0_65, %c0_66], %59 {strides = array<i32>} : memref<1x16x64xf32, #tpu.memory_space<vmem>>, vector<1x16x64xf32>,
    return
  }
  func.func @transform_0(%arg0: i32) -> (i32, i32, i32) {
    %c0_i32 = arith.constant 0 : i32
    %c0_i32_0 = arith.constant 0 : i32
    %c0_i32_1 = arith.constant 0 : i32
    return %arg0, %c0_i32, %c0_i32_0 : i32, i32, i32
  }
  func.func @transform_1(%arg0: i32) -> (i32, i32) {
    %c0_i32 = arith.constant 0 : i32
    %c0_i32_0 = arith.constant 0 : i32
    %c0_i32_1 = arith.constant 0 : i32
    return %c0_i32, %c0_i32_0 : i32, i32
  }
  func.func @transform_2(%arg0: i32) -> (i32, i32) {
    %c0_i32 = arith.constant 0 : i32
    %c0_i32_0 = arith.constant 0 : i32
    %c0_i32_1 = arith.constant 0 : i32
    return %c0_i32, %c0_i32_0 : i32, i32
  }
  func.func @transform_3(%arg0: i32) -> (i32, i32, i32) {
    %c0_i32 = arith.constant 0 : i32
    %c0_i32_0 = arith.constant 0 : i32
    %c0_i32_1 = arith.constant 0 : i32
    %c0_i32_2 = arith.constant 0 : i32
    return %c0_i32, %c0_i32_0, %c0_i32_1 : i32, i32, i32
  }
  func.func @transform_4(%arg0: i32) -> (i32, i32) {
    %c0_i32 = arith.constant 0 : i32
    %c0_i32_0 = arith.constant 0 : i32
    %c0_i32_1 = arith.constant 0 : i32
    return %c0_i32, %c0_i32_0 : i32, i32
  }
  func.func @transform_5(%arg0: i32) -> (i32, i32, i32) {
    %c0_i32 = arith.constant 0 : i32
    %c0_i32_0 = arith.constant 0 : i32
    %c0_i32_1 = arith.constant 0 : i32
    %c0_i32_2 = arith.constant 0 : i32
    return %c0_i32, %c0_i32_0, %c0_i32_1 : i32, i32, i32
  }
  func.func @transform_6(%arg0: i32) -> (i32, i32, i32) {
    %c0_i32 = arith.constant 0 : i32
    %c0_i32_0 = arith.constant 0 : i32
    %c0_i32_1 = arith.constant 0 : i32
    return %arg0, %c0_i32, %c0_i32_0 : i32, i32, i32
  }
}

</mosaic_0001>

<llo_original>
// kernel: tpu_custom_call.1
$region0: #{tpu_custom_call.1}
  #allocation0 [shape = 'u32[]', space=smem, size = 0x4, offset = 0x4, fixed_abs, tag = 'smem constant byte address 0x4 - core index']
  #allocation1 [shape = 'u32[144,128]{1,0:T(1,128)}', space=vmem, size = 0x12000, scoped, tag = 'internal scratch']
  #allocation2 [shape = 'f32[1,18,64]{2,1,0:T(8,128)}', space=vmem, size = 0x3000, scoped, tag = 'scratch operand']
  %s0 = inlined_call_operand.hbm [shape: f32[2,16,64], index: 0, kind: input, shape index: {}]
  %s1 = inlined_call_operand.vmem [shape: f32[1,64], index: 1, kind: input, shape index: {}]
  %s2 = inlined_call_operand.vmem [shape: f32[1,64], index: 2, kind: input, shape index: {}]
  %s3 = inlined_call_operand.hbm [shape: f32[3,64,64], index: 3, kind: input, shape index: {}]
  %s4 = inlined_call_operand.vmem [shape: f32[1,64], index: 4, kind: input, shape index: {}]
  %s5 = inlined_call_operand.hbm [shape: f32[3,64,64], index: 5, kind: input, shape index: {}]
  %s6 = inlined_call_operand.hbm [shape: f32[2,16,64], index: 6, kind: output, shape index: {}]
  %s7 = sld [smem:[#allocation0]]
  $region69: #{tpu_custom_call.1} parent=0
    _
  %s9 = ssub.s32 1, %s7
  %s10 = scalar_select 0, %s9, %s7
  $region1: #{tpu_custom_call.1} parent=0
    #allocation3 [shape = 'u8[16384]{0}', space=vmem, size = 0x4000, scoped, tag = 'input window, operand 0']
    #allocation4 [shape = 's32[2]{0}', space=sflag, size = 0x8, scoped, tag = 'scoped memory for tpu_custom_call.1']
    #allocation5 [shape = 's32[2]{0}', space=sflag, size = 0x8, scoped, tag = 'scoped memory for tpu_custom_call.1']
    #allocation6 [shape = 'u8[98304]{0}', space=vmem, size = 0x18000, scoped, tag = 'input window, operand 3, single buffered']
    #allocation7 [shape = 's32[1]{0}', space=sflag, size = 0x4, scoped, tag = 'scoped memory for tpu_custom_call.1']
    #allocation8 [shape = 'u8[98304]{0}', space=vmem, size = 0x18000, scoped, tag = 'input window, operand 5, single buffered']
    #allocation9 [shape = 'u8[16384]{0}', space=vmem, size = 0x4000, scoped, tag = 'output window, operand 0']
    %11 = vsyncpa [#allocation4], 0
    %s12 = scalar_lea.sflag [#allocation4], 1
    %13 = vsyncpa %s12, 0
    %14 = vsyncpa [#allocation7], 0
    %15 = vsyncpa [#allocation5], 0
    %s16 = scalar_lea.sflag [#allocation5], 1
    %17 = vsyncpa %s16, 0
    loop: start=0, step=1, limit=4
    $region2: #{tpu_custom_call.1} parent=1 // loop_pre_header
      _
    $region3: #{tpu_custom_call.1} parent=1 // loop_header
      %s19 = sphi 0, %s23
      %p20 = scmp.ge.s32.totalorder %s19, 4
      %s29 = sphi 0, %s31
      %s32 = sphi 0, %s29
      %s33 = sphi 0, %s32
      %s49 = sphi 0, %s33
      %s53 = sphi 0, %s53
      %s55 = sphi 0, %s53
      %s56 = sphi 0, %s55
      %s70 = sphi 0, %s56
      %s74 = sphi 0, %s74
      %s76 = sphi 0, %s74
      %s77 = sphi 0, %s76
      %s91 = sphi 0, %s77
      %s95 = sphi 0, %s95
      %s97 = sphi 0, %s95
      %s98 = sphi 0, %s97
      %s112 = sphi 0, %s98
      %s116 = sphi 0, %s116
      %s118 = sphi 0, %s116
      %s119 = sphi 0, %s118
      %s133 = sphi 0, %s119
      %s137 = sphi 0, %s137
      %s139 = sphi 0, %s137
      %s140 = sphi 0, %s139
      %s154 = sphi 0, %s140
      %s160 = sphi 0, %s162
      %s163 = sphi 0, %s160
      %s164 = sphi 0, %s163
      %s180 = sphi 0, %s164
    $region4: #{tpu_custom_call.1} parent=1 // loop_header_branch
      %22 = sbr.rel (%p20) target = $region8
    $region5: #{tpu_custom_call.1} parent=1 // loop_body
      %s24 = ssub.s32 %s19, 1
      %s25 = ssub.s32 %s19, 2
      %s26 = sadd.s32 %s19, 1
      %s27 = ssub.s32 %s19, %s26
      %p28 = scmp.eq.s32.totalorder %s27, 0
      %s30 = sadd.s32 %s29, 1
      %s31 = scalar_select %p28, %s29, %s30
      %p34 = pneg %p28
      %p35 = scmp.eq.s32.totalorder %s19, 1
      %p36 = por %p34, %p35
      %p37 = scmp.ne.s32.totalorder %s29, %s32
      %p38 = scmp.eq.s32.totalorder %s19, 0
      %p39 = por %p37, %p38
      %p40 = scmp.ne.s32.totalorder %s29, %s32
      %p41 = scmp.eq.s32.totalorder %s24, 1
      %p42 = por %p40, %p41
      %p43 = scmp.ne.s32.totalorder %s32, %s33
      %p44 = scmp.eq.s32.totalorder %s24, 0
      %p45 = por %p43, %p44
      %p46 = scmp.ne.s32.totalorder %s32, %s33
      %p47 = scmp.eq.s32.totalorder %s25, 1
      %p48 = por %p46, %p47
      %p50 = scmp.ne.s32.totalorder %s33, %s49
      %p51 = scmp.eq.s32.totalorder %s25, 0
      %p52 = por %p50, %p51
      %s54 = sadd.s32 %s53, 1
      %p57 = scmp.eq.s32.totalorder %s19, 1
      %p58 = scmp.ne.s32.totalorder %s53, %s55
      %p59 = scmp.eq.s32.totalorder %s19, 0
      %p60 = por %p58, %p59
      %p61 = scmp.ne.s32.totalorder %s53, %s55
      %p62 = scmp.eq.s32.totalorder %s24, 1
      %p63 = por %p61, %p62
      %p64 = scmp.ne.s32.totalorder %s55, %s56
      %p65 = scmp.eq.s32.totalorder %s24, 0
      %p66 = por %p64, %p65
      %p67 = scmp.ne.s32.totalorder %s55, %s56
      %p68 = scmp.eq.s32.totalorder %s25, 1
      %p69 = por %p67, %p68
      %p71 = scmp.ne.s32.totalorder %s56, %s70
      %p72 = scmp.eq.s32.totalorder %s25, 0
      %p73 = por %p71, %p72
      %s75 = sadd.s32 %s74, 1
      %p78 = scmp.eq.s32.totalorder %s19, 1
      %p79 = scmp.ne.s32.totalorder %s74, %s76
      %p80 = scmp.eq.s32.totalorder %s19, 0
      %p81 = por %p79, %p80
      %p82 = scmp.ne.s32.totalorder %s74, %s76
      %p83 = scmp.eq.s32.totalorder %s24, 1
      %p84 = por %p82, %p83
      %p85 = scmp.ne.s32.totalorder %s76, %s77
      %p86 = scmp.eq.s32.totalorder %s24, 0
      %p87 = por %p85, %p86
      %p88 = scmp.ne.s32.totalorder %s76, %s77
      %p89 = scmp.eq.s32.totalorder %s25, 1
      %p90 = por %p88, %p89
      %p92 = scmp.ne.s32.totalorder %s77, %s91
      %p93 = scmp.eq.s32.totalorder %s25, 0
      %p94 = por %p92, %p93
      %s96 = sadd.s32 %s95, 1
      %p99 = scmp.eq.s32.totalorder %s19, 1
      %p100 = scmp.ne.s32.totalorder %s95, %s97
      %p101 = scmp.eq.s32.totalorder %s19, 0
      %p102 = por %p100, %p101
      %p103 = scmp.ne.s32.totalorder %s95, %s97
      %p104 = scmp.eq.s32.totalorder %s24, 1
      %p105 = por %p103, %p104
      %p106 = scmp.ne.s32.totalorder %s97, %s98
      %p107 = scmp.eq.s32.totalorder %s24, 0
      %p108 = por %p106, %p107
      %p109 = scmp.ne.s32.totalorder %s97, %s98
      %p110 = scmp.eq.s32.totalorder %s25, 1
      %p111 = por %p109, %p110
      %p113 = scmp.ne.s32.totalorder %s98, %s112
      %p114 = scmp.eq.s32.totalorder %s25, 0
      %p115 = por %p113, %p114
      %s117 = sadd.s32 %s116, 1
      %p120 = scmp.eq.s32.totalorder %s19, 1
      %p121 = scmp.ne.s32.totalorder %s116, %s118
      %p122 = scmp.eq.s32.totalorder %s19, 0
      %p123 = por %p121, %p122
      %p124 = scmp.ne.s32.totalorder %s116, %s118
      %p125 = scmp.eq.s32.totalorder %s24, 1
      %p126 = por %p124, %p125
      %p127 = scmp.ne.s32.totalorder %s118, %s119
      %p128 = scmp.eq.s32.totalorder %s24, 0
      %p129 = por %p127, %p128
      %p130 = scmp.ne.s32.totalorder %s118, %s119
      %p131 = scmp.eq.s32.totalorder %s25, 1
      %p132 = por %p130, %p131
      %p134 = scmp.ne.s32.totalorder %s119, %s133
      %p135 = scmp.eq.s32.totalorder %s25, 0
      %p136 = por %p134, %p135
      %s138 = sadd.s32 %s137, 1
      %p141 = scmp.eq.s32.totalorder %s19, 1
      %p142 = scmp.ne.s32.totalorder %s137, %s139
      %p143 = scmp.eq.s32.totalorder %s19, 0
      %p144 = por %p142, %p143
      %p145 = scmp.ne.s32.totalorder %s137, %s139
      %p146 = scmp.eq.s32.totalorder %s24, 1
      %p147 = por %p145, %p146
      %p148 = scmp.ne.s32.totalorder %s139, %s140
      %p149 = scmp.eq.s32.totalorder %s24, 0
      %p150 = por %p148, %p149
      %p151 = scmp.ne.s32.totalorder %s139, %s140
      %p152 = scmp.eq.s32.totalorder %s25, 1
      %p153 = por %p151, %p152
      %p155 = scmp.ne.s32.totalorder %s140, %s154
      %p156 = scmp.eq.s32.totalorder %s25, 0
      %p157 = por %p155, %p156
      %s158 = ssub.s32 %s19, %s26
      %p159 = scmp.eq.s32.totalorder %s158, 0
      %s161 = sadd.s32 %s160, 1
      %s162 = scalar_select %p159, %s160, %s161
      %p165 = pneg %p159
      %p166 = scmp.eq.s32.totalorder %s19, 1
      %p167 = por %p165, %p166
      %p168 = scmp.ne.s32.totalorder %s160, %s163
      %p169 = scmp.eq.s32.totalorder %s19, 0
      %p170 = por %p168, %p169
      %p171 = scmp.ne.s32.totalorder %s160, %s163
      %p172 = scmp.eq.s32.totalorder %s24, 1
      %p173 = por %p171, %p172
      %p174 = scmp.ne.s32.totalorder %s163, %s164
      %p175 = scmp.eq.s32.totalorder %s24, 0
      %p176 = por %p174, %p175
      %p177 = scmp.ne.s32.totalorder %s163, %s164
      %p178 = scmp.eq.s32.totalorder %s25, 1
      %p179 = por %p177, %p178
      %p181 = scmp.ne.s32.totalorder %s164, %s180
      %p182 = scmp.eq.s32.totalorder %s25, 0
      %p183 = por %p181, %p182
      %p184 = scmp.le.s32.totalorder 1, %s19
      %p185 = scmp.lt.s32.totalorder %s19, 3
      %p186 = pnand %p184, %p185
      %p187 = pneg %p186
      // Predicated region
      $region9: #{tpu_custom_call.1} parent=5 // pred_check
        _
      $region10: #{tpu_custom_call.1} parent=5 // pred_check_branch
        %189 = sbr.rel (%p186) target = $region12
      $region11: #{tpu_custom_call.1} parent=5 // pred_region
        %s190 = ssub.s32 %s19, 1
        // Predicated region
        $region13: #{tpu_custom_call.1} parent=11 // pred_check
          %p191 = pneg %p66
        $region14: #{tpu_custom_call.1} parent=11 // pred_check_branch
          %193 = sbr.rel (%p191) target = $region16
        $region15: #{tpu_custom_call.1} parent=11 // pred_region
          _
        $region16: #{tpu_custom_call.1} parent=11 // pred_fallthru
          _
        // Predicated region
        $region17: #{tpu_custom_call.1} parent=11 // pred_check
          %p194 = pneg %p87
        $region18: #{tpu_custom_call.1} parent=11 // pred_check_branch
          %196 = sbr.rel (%p194) target = $region20
        $region19: #{tpu_custom_call.1} parent=11 // pred_region
          _
        $region20: #{tpu_custom_call.1} parent=11 // pred_fallthru
          _
        // Predicated region
        $region21: #{tpu_custom_call.1} parent=11 // pred_check
          %p197 = pneg %p108
        $region22: #{tpu_custom_call.1} parent=11 // pred_check_branch
          %199 = sbr.rel (%p197) target = $region24
        $region23: #{tpu_custom_call.1} parent=11 // pred_region
          %s201 = ssub.s32 3072, 3072
          %202 = vsyncadd [#allocation7], %s201
          %s203 = sshll.u32 [#allocation6], 4
          %s204 = int_to_ptr.vmem [resolvable:$true] %s203
          %209 = dma.hbm_to_vmem [thread:$0]  %s3, 3072, %s204, [#allocation7], 128, 128, 8
        $region24: #{tpu_custom_call.1} parent=11 // pred_fallthru
          _
        // Predicated region
        $region25: #{tpu_custom_call.1} parent=11 // pred_check
          %p210 = pneg %p129
        $region26: #{tpu_custom_call.1} parent=11 // pred_check_branch
          %212 = sbr.rel (%p210) target = $region28
        $region27: #{tpu_custom_call.1} parent=11 // pred_region
          _
        $region28: #{tpu_custom_call.1} parent=11 // pred_fallthru
          _
        // Predicated region
        $region29: #{tpu_custom_call.1} parent=11 // pred_check
          %p213 = pneg %p150
        $region30: #{tpu_custom_call.1} parent=11 // pred_check_branch
          %215 = sbr.rel (%p213) target = $region32
        $region31: #{tpu_custom_call.1} parent=11 // pred_region
          %s217 = ssub.s32 3072, 3072
          %218 = vsyncadd [#allocation7], %s217
          %s219 = sshll.u32 [#allocation8], 4
          %s220 = int_to_ptr.vmem [resolvable:$true] %s219
          %225 = dma.hbm_to_vmem [thread:$0]  %s5, 3072, %s220, [#allocation7], 128, 128, 8
        $region32: #{tpu_custom_call.1} parent=11 // pred_fallthru
          _
      $region12: #{tpu_custom_call.1} parent=5 // pred_fallthru
        _
      %p226 = scmp.lt.s32.totalorder %s19, 2
      // Predicated region
      $region33: #{tpu_custom_call.1} parent=5 // pred_check
        %p227 = pneg %p226
      $region34: #{tpu_custom_call.1} parent=5 // pred_check_branch
        %229 = sbr.rel (%p227) target = $region36
      $region35: #{tpu_custom_call.1} parent=5 // pred_region
        // Predicated region
        $region37: #{tpu_custom_call.1} parent=35 // pred_check
          %p230 = pneg %p39
        $region38: #{tpu_custom_call.1} parent=35 // pred_check_branch
          %232 = sbr.rel (%p230) target = $region40
        $region39: #{tpu_custom_call.1} parent=35 // pred_region
          %s233 = sand.u32 %s29, 1
          %s234 = scalar_lea.sflag [#allocation4], %s233
          %s235 = sand.u32 %s29, 1
          %s236 = smul.addr %s235, 16
          %s237 = scalar_lea.vmem [#allocation3], %s236
          %s239 = ssub.s32 256, 256
          %240 = vsyncadd %s234, %s239
          %s241 = smul.addr %s19, 2
          %s242 = smul.addr %s241, 128
          %s243 = scalar_lea.hbm %s0, %s242
          %s244 = sshll.u32 %s237, 4
          %s245 = int_to_ptr.vmem [resolvable:$true] %s244
          %250 = dma.hbm_to_vmem [thread:$0]  %s243, 256, %s245, %s234, 128, 128, 8
        $region40: #{tpu_custom_call.1} parent=35 // pred_fallthru
          _
      $region36: #{tpu_custom_call.1} parent=5 // pred_fallthru
        _
      %p251 = scmp.le.s32.totalorder 1, %s19
      %p252 = scmp.lt.s32.totalorder %s19, 3
      %p253 = pnand %p251, %p252
      %p254 = pneg %p253
      // Predicated region
      $region41: #{tpu_custom_call.1} parent=5 // pred_check
        _
      $region42: #{tpu_custom_call.1} parent=5 // pred_check_branch
        %256 = sbr.rel (%p253) target = $region44
      $region43: #{tpu_custom_call.1} parent=5 // pred_region
        %s257 = ssub.s32 %s19, 1
        %s258 = sand.u32 %s32, 1
        %s259 = scalar_lea.sflag [#allocation4], %s258
        %s260 = sand.u32 %s32, 1
        %s261 = smul.addr %s260, 16
        %s262 = scalar_lea.vmem [#allocation3], %s261
        // Predicated region
        $region45: #{tpu_custom_call.1} parent=43 // pred_check
          %p263 = pneg %p45
        $region46: #{tpu_custom_call.1} parent=43 // pred_check_branch
          %265 = sbr.rel (%p263) target = $region48
        $region47: #{tpu_custom_call.1} parent=43 // pred_region
          %266 = dma.done %s259, 256
        $region48: #{tpu_custom_call.1} parent=43 // pred_fallthru
          _
        // Predicated region
        $region49: #{tpu_custom_call.1} parent=43 // pred_check
          %p267 = pneg %p108
        $region50: #{tpu_custom_call.1} parent=43 // pred_check_branch
          %269 = sbr.rel (%p267) target = $region52
        $region51: #{tpu_custom_call.1} parent=43 // pred_region
          %270 = dma.done [#allocation7], 3072
        $region52: #{tpu_custom_call.1} parent=43 // pred_fallthru
          _
        // Predicated region
        $region53: #{tpu_custom_call.1} parent=43 // pred_check
          %p271 = pneg %p150
        $region54: #{tpu_custom_call.1} parent=43 // pred_check_branch
          %273 = sbr.rel (%p271) target = $region56
        $region55: #{tpu_custom_call.1} parent=43 // pred_region
          %274 = dma.done [#allocation7], 3072
        $region56: #{tpu_custom_call.1} parent=43 // pred_fallthru
          _
        %s275 = sand.u32 %s32, 1
        %s276 = scalar_lea.sflag [#allocation4], %s275
        %s277 = sand.u32 %s32, 1
        %s278 = smul.addr %s277, 16
        %s279 = scalar_lea.vmem [#allocation3], %s278
        %p280 = pneg %p45
        %p281 = pneg %p42
        %p282 = pneg %p66
        %p283 = pneg %p63
        %p284 = pneg %p87
        %p285 = pneg %p84
        %p286 = pneg %p108
        %p287 = pneg %p105
        %p288 = pneg %p129
        %p289 = pneg %p126
        %p290 = pneg %p150
        %p291 = pneg %p147
        %p292 = pneg %p176
        %p293 = pneg %p173
        %s294 = sand.u32 %s163, 1
        %s295 = scalar_lea.sflag [#allocation5], %s294
        %s296 = sand.u32 %s163, 1
        %s297 = smul.addr %s296, 16
        %s298 = scalar_lea.vmem [#allocation9], %s297
        %vm299 = vcmask 516096
        %300 = vst.msk [vmem:[#allocation2] sm:$0x1] %vm299, 0.0
        %301 = vst.msk [vmem:[#allocation2 + $0x11] sm:$0x1] %vm299, 0.0
        %v302 = vld [vmem:[%s262] sm:$0xff]
        %v303 = vld [vmem:[%s262 + $0x8] sm:$0xff]
        %v304 = vld [vmem:[%s1] sm:$0x1]
        %v306 = vlaneseq
        %v307 = vshrl.u32 %v306, 7
        %v308 = vsub.s32 0, %v307
        %v309 = vrot.slane %v304, %v308
        %v311 = vmul.f32 %v302, %v309
        %v312 = vmul.f32 %v303, %v309
        %v313 = vld [vmem:[%s2] sm:$0x1]
        %v315 = vlaneseq
        %v316 = vshrl.u32 %v315, 7
        %v317 = vsub.s32 0, %v316
        %v318 = vrot.slane %v313, %v317
        %v320 = vadd.f32 %v311, %v318
        %v321 = vadd.f32 %v312, %v318
        %v322 = vmax.f32 %v320, 0.0
        %v323 = vmax.f32 %v321, 0.0
        %vm324 = vcmask 523264
        %325 = vst.msk [vmem:[#allocation2 + $0x1] sm:$0xff] %vm324, %v322
        %326 = vst.msk [vmem:[#allocation2 + $0x9] sm:$0xff] %vm324, %v323
        %v327 = vld [vmem:[#allocation2] sm:$0xff]
        %v328 = vld [vmem:[#allocation2 + $0x8] sm:$0xff]
        %v329 = vld [vmem:[#allocation6] sm:$0xff]
        %v330 = vld [vmem:[#allocation6 + $0x8] sm:$0xff]
        %v331 = vld [vmem:[#allocation6 + $0x10] sm:$0xff]
        %v332 = vld [vmem:[#allocation6 + $0x18] sm:$0xff]
        %v333 = vld [vmem:[#allocation6 + $0x20] sm:$0xff]
        %v334 = vld [vmem:[#allocation6 + $0x28] sm:$0xff]
        %v335 = vld [vmem:[#allocation6 + $0x30] sm:$0xff]
        %v336 = vld [vmem:[#allocation6 + $0x38] sm:$0xff]
        %v337 = vld [vmem:[#allocation2 + $0x1] sm:$0xff]
        %v338 = vld [vmem:[#allocation2 + $0x9] sm:$0xff]
        %s339 = scalar_lea.vmem [#allocation6], 64
        %v340 = vld [vmem:[%s339] sm:$0xff]
        %v341 = vld [vmem:[%s339 + $0x8] sm:$0xff]
        %v342 = vld [vmem:[%s339 + $0x10] sm:$0xff]
        %v343 = vld [vmem:[%s339 + $0x18] sm:$0xff]
        %v344 = vld [vmem:[%s339 + $0x20] sm:$0xff]
        %v345 = vld [vmem:[%s339 + $0x28] sm:$0xff]
        %v346 = vld [vmem:[%s339 + $0x30] sm:$0xff]
        %v347 = vld [vmem:[%s339 + $0x38] sm:$0xff]
        %v349 = vsel %vm324, %v337, 0
        %v352 = vsel %vm324, %v338, 0
        %354 = vmatprep.subr.mxu0 0.0
        %355 = vmatpush1.msra.mxu0 0.0
        %356 = vmatprep.subr.mxu0 0.0
        %357 = vmatpush1.msra.mxu0 0.0
        %358 = vmatprep.subr.mxu0 0.0
        %359 = vmatpush1.msra.mxu0 0.0
        %360 = vmatprep.subr.mxu0 0.0
        %361 = vmatpush1.msra.mxu0 0.0
        %362 = vmatprep.subr.mxu0 0.0
        %363 = vmatpush1.msra.mxu0 0.0
        %364 = vmatprep.subr.mxu0 0.0
        %365 = vmatpush1.msra.mxu0 0.0
        %366 = vmatprep.subr.mxu0 0.0
        %367 = vmatpush1.msra.mxu0 0.0
        %368 = vmatprep.subr.mxu0 0.0
        %369 = vmatpush1.msra.mxu0 0.0
        %370 = vmatprep.subr.mxu0 0.0
        %371 = vmatpush1.msra.mxu0 %v347
        %372 = vmatprep.subr.mxu0 0.0
        %373 = vmatpush1.msra.mxu0 %v346
        %374 = vmatprep.subr.mxu0 0.0
        %375 = vmatpush1.msra.mxu0 %v345
        %376 = vmatprep.subr.mxu0 0.0
        %377 = vmatpush1.msra.mxu0 %v344
        %378 = vmatprep.subr.mxu0 0.0
        %379 = vmatpush1.msra.mxu0 %v343
        %380 = vmatprep.subr.mxu0 0.0
        %381 = vmatpush1.msra.mxu0 %v342
        %382 = vmatprep.subr.mxu0 0.0
        %383 = vmatpush1.msra.mxu0 %v341
        %384 = vmatprep.subr.mxu0 0.0
        %385 = vmatpush1.msra.mxu0 %v340
        %386 = vmatprep.subr.mxu0 0.0
        %387 = vmatpush2.msra.mxu0 0.0
        %388 = vmatprep.subr.mxu0 0.0
        %389 = vmatpush2.msra.mxu0 0.0
        %390 = vmatprep.subr.mxu0 0.0
        %391 = vmatpush2.msra.mxu0 0.0
        %392 = vmatprep.subr.mxu0 0.0
        %393 = vmatpush2.msra.mxu0 0.0
        %394 = vmatprep.subr.mxu0 0.0
        %395 = vmatpush2.msra.mxu0 0.0
        %396 = vmatprep.subr.mxu0 0.0
        %397 = vmatpush2.msra.mxu0 0.0
        %398 = vmatprep.subr.mxu0 0.0
        %399 = vmatpush2.msra.mxu0 0.0
        %400 = vmatprep.subr.mxu0 0.0
        %401 = vmatpush2.msra.mxu0 0.0
        %402 = vmatprep.subr.mxu0 0.0
        %403 = vmatpush2.msra.mxu0 0.0
        %404 = vmatprep.subr.mxu0 0.0
        %405 = vmatpush2.msra.mxu0 0.0
        %406 = vmatprep.subr.mxu0 0.0
        %407 = vmatpush2.msra.mxu0 0.0
        %408 = vmatprep.subr.mxu0 0.0
        %409 = vmatpush2.msra.mxu0 0.0
        %410 = vmatprep.subr.mxu0 0.0
        %411 = vmatpush2.msra.mxu0 0.0
        %412 = vmatprep.subr.mxu0 0.0
        %413 = vmatpush2.msra.mxu0 0.0
        %414 = vmatprep.subr.mxu0 0.0
        %415 = vmatpush2.msra.mxu0 0.0
        %416 = vmatprep.subr.mxu0 0.0
        %417 = vmatpush2.msra.mxu0 0.0
        %418 = vmatprep.mubr.f32.mxu0 0.0
        %419 = vmatmul.mubr.f32.gmra.mxu0 %v349
        %v420 = vpop.f32.mrf.mxu0
        %v421 = vadd.f32 0.0, %v420
        %v422 = vpop.f32.mrf.mxu0
        %423 = vmatprep.mubr.f32.mxu0 0.0
        %424 = vmatmul.mubr.f32.gmra.mxu0 %v352
        %v425 = vpop.f32.mrf.mxu0
        %v426 = vadd.f32 0.0, %v425
        %v427 = vpop.f32.mrf.mxu0
        %428 = vdwg.mxu0
        %v430 = vsel %vm324, %v327, 0
        %v433 = vsel %vm324, %v328, 0
        %435 = vmatprep.subr.mxu0 0.0
        %436 = vmatpush1.msra.mxu0 0.0
        %437 = vmatprep.subr.mxu0 0.0
        %438 = vmatpush1.msra.mxu0 0.0
        %439 = vmatprep.subr.mxu0 0.0
        %440 = vmatpush1.msra.mxu0 0.0
        %441 = vmatprep.subr.mxu0 0.0
        %442 = vmatpush1.msra.mxu0 0.0
        %443 = vmatprep.subr.mxu0 0.0
        %444 = vmatpush1.msra.mxu0 0.0
        %445 = vmatprep.subr.mxu0 0.0
        %446 = vmatpush1.msra.mxu0 0.0
        %447 = vmatprep.subr.mxu0 0.0
        %448 = vmatpush1.msra.mxu0 0.0
        %449 = vmatprep.subr.mxu0 0.0
        %450 = vmatpush1.msra.mxu0 0.0
        %451 = vmatprep.subr.mxu0 0.0
        %452 = vmatpush1.msra.mxu0 %v336
        %453 = vmatprep.subr.mxu0 0.0
        %454 = vmatpush1.msra.mxu0 %v335
        %455 = vmatprep.subr.mxu0 0.0
        %456 = vmatpush1.msra.mxu0 %v334
        %457 = vmatprep.subr.mxu0 0.0
        %458 = vmatpush1.msra.mxu0 %v333
        %459 = vmatprep.subr.mxu0 0.0
        %460 = vmatpush1.msra.mxu0 %v332
        %461 = vmatprep.subr.mxu0 0.0
        %462 = vmatpush1.msra.mxu0 %v331
        %463 = vmatprep.subr.mxu0 0.0
        %464 = vmatpush1.msra.mxu0 %v330
        %465 = vmatprep.subr.mxu0 0.0
        %466 = vmatpush1.msra.mxu0 %v329
        %467 = vmatprep.subr.mxu0 0.0
        %468 = vmatpush2.msra.mxu0 0.0
        %469 = vmatprep.subr.mxu0 0.0
        %470 = vmatpush2.msra.mxu0 0.0
        %471 = vmatprep.subr.mxu0 0.0
        %472 = vmatpush2.msra.mxu0 0.0
        %473 = vmatprep.subr.mxu0 0.0
        %474 = vmatpush2.msra.mxu0 0.0
        %475 = vmatprep.subr.mxu0 0.0
        %476 = vmatpush2.msra.mxu0 0.0
        %477 = vmatprep.subr.mxu0 0.0
        %478 = vmatpush2.msra.mxu0 0.0
        %479 = vmatprep.subr.mxu0 0.0
        %480 = vmatpush2.msra.mxu0 0.0
        %481 = vmatprep.subr.mxu0 0.0
        %482 = vmatpush2.msra.mxu0 0.0
        %483 = vmatprep.subr.mxu0 0.0
        %484 = vmatpush2.msra.mxu0 0.0
        %485 = vmatprep.subr.mxu0 0.0
        %486 = vmatpush2.msra.mxu0 0.0
        %487 = vmatprep.subr.mxu0 0.0
        %488 = vmatpush2.msra.mxu0 0.0
        %489 = vmatprep.subr.mxu0 0.0
        %490 = vmatpush2.msra.mxu0 0.0
        %491 = vmatprep.subr.mxu0 0.0
        %492 = vmatpush2.msra.mxu0 0.0
        %493 = vmatprep.subr.mxu0 0.0
        %494 = vmatpush2.msra.mxu0 0.0
        %495 = vmatprep.subr.mxu0 0.0
        %496 = vmatpush2.msra.mxu0 0.0
        %497 = vmatprep.subr.mxu0 0.0
        %498 = vmatpush2.msra.mxu0 0.0
        %499 = vmatprep.mubr.f32.mxu0 0.0
        %500 = vmatmul.mubr.f32.gmra.mxu0 %v430
        %v501 = vpop.f32.mrf.mxu0
        %v502 = vadd.f32 %v421, %v501
        %v503 = vpop.f32.mrf.mxu0
        %504 = vmatprep.mubr.f32.mxu0 0.0
        %505 = vmatmul.mubr.f32.gmra.mxu0 %v433
        %v506 = vpop.f32.mrf.mxu0
        %v507 = vadd.f32 %v426, %v506
        %v508 = vpop.f32.mrf.mxu0
        %509 = vdwg.mxu0
        %v510 = vld [vmem:[#allocation2 + $0x2] sm:$0xff]
        %v511 = vld [vmem:[#allocation2 + $0xa] sm:$0xff]
        %s512 = scalar_lea.vmem [#allocation6], 128
        %v513 = vld [vmem:[%s512] sm:$0xff]
        %v514 = vld [vmem:[%s512 + $0x8] sm:$0xff]
        %v515 = vld [vmem:[%s512 + $0x10] sm:$0xff]
        %v516 = vld [vmem:[%s512 + $0x18] sm:$0xff]
        %v517 = vld [vmem:[%s512 + $0x20] sm:$0xff]
        %v518 = vld [vmem:[%s512 + $0x28] sm:$0xff]
        %v519 = vld [vmem:[%s512 + $0x30] sm:$0xff]
        %v520 = vld [vmem:[%s512 + $0x38] sm:$0xff]
        %v522 = vsel %vm324, %v510, 0
        %v525 = vsel %vm324, %v511, 0
        %527 = vmatprep.subr.mxu0 0.0
        %528 = vmatpush1.msra.mxu0 0.0
        %529 = vmatprep.subr.mxu0 0.0
        %530 = vmatpush1.msra.mxu0 0.0
        %531 = vmatprep.subr.mxu0 0.0
        %532 = vmatpush1.msra.mxu0 0.0
        %533 = vmatprep.subr.mxu0 0.0
        %534 = vmatpush1.msra.mxu0 0.0
        %535 = vmatprep.subr.mxu0 0.0
        %536 = vmatpush1.msra.mxu0 0.0
        %537 = vmatprep.subr.mxu0 0.0
        %538 = vmatpush1.msra.mxu0 0.0
        %539 = vmatprep.subr.mxu0 0.0
        %540 = vmatpush1.msra.mxu0 0.0
        %541 = vmatprep.subr.mxu0 0.0
        %542 = vmatpush1.msra.mxu0 0.0
        %543 = vmatprep.subr.mxu0 0.0
        %544 = vmatpush1.msra.mxu0 %v520
        %545 = vmatprep.subr.mxu0 0.0
        %546 = vmatpush1.msra.mxu0 %v519
        %547 = vmatprep.subr.mxu0 0.0
        %548 = vmatpush1.msra.mxu0 %v518
        %549 = vmatprep.subr.mxu0 0.0
        %550 = vmatpush1.msra.mxu0 %v517
        %551 = vmatprep.subr.mxu0 0.0
        %552 = vmatpush1.msra.mxu0 %v516
        %553 = vmatprep.subr.mxu0 0.0
        %554 = vmatpush1.msra.mxu0 %v515
        %555 = vmatprep.subr.mxu0 0.0
        %556 = vmatpush1.msra.mxu0 %v514
        %557 = vmatprep.subr.mxu0 0.0
        %558 = vmatpush1.msra.mxu0 %v513
        %559 = vmatprep.subr.mxu0 0.0
        %560 = vmatpush2.msra.mxu0 0.0
        %561 = vmatprep.subr.mxu0 0.0
        %562 = vmatpush2.msra.mxu0 0.0
        %563 = vmatprep.subr.mxu0 0.0
        %564 = vmatpush2.msra.mxu0 0.0
        %565 = vmatprep.subr.mxu0 0.0
        %566 = vmatpush2.msra.mxu0 0.0
        %567 = vmatprep.subr.mxu0 0.0
        %568 = vmatpush2.msra.mxu0 0.0
        %569 = vmatprep.subr.mxu0 0.0
        %570 = vmatpush2.msra.mxu0 0.0
        %571 = vmatprep.subr.mxu0 0.0
        %572 = vmatpush2.msra.mxu0 0.0
        %573 = vmatprep.subr.mxu0 0.0
        %574 = vmatpush2.msra.mxu0 0.0
        %575 = vmatprep.subr.mxu0 0.0
        %576 = vmatpush2.msra.mxu0 0.0
        %577 = vmatprep.subr.mxu0 0.0
        %578 = vmatpush2.msra.mxu0 0.0
        %579 = vmatprep.subr.mxu0 0.0
        %580 = vmatpush2.msra.mxu0 0.0
        %581 = vmatprep.subr.mxu0 0.0
        %582 = vmatpush2.msra.mxu0 0.0
        %583 = vmatprep.subr.mxu0 0.0
        %584 = vmatpush2.msra.mxu0 0.0
        %585 = vmatprep.subr.mxu0 0.0
        %586 = vmatpush2.msra.mxu0 0.0
        %587 = vmatprep.subr.mxu0 0.0
        %588 = vmatpush2.msra.mxu0 0.0
        %589 = vmatprep.subr.mxu0 0.0
        %590 = vmatpush2.msra.mxu0 0.0
        %591 = vmatprep.mubr.f32.mxu0 0.0
        %592 = vmatmul.mubr.f32.gmra.mxu0 %v522
        %v593 = vpop.f32.mrf.mxu0
        %v594 = vadd.f32 0.0, %v593
        %v595 = vpop.f32.mrf.mxu0
        %596 = vmatprep.mubr.f32.mxu0 0.0
        %597 = vmatmul.mubr.f32.gmra.mxu0 %v525
        %v598 = vpop.f32.mrf.mxu0
        %v599 = vadd.f32 0.0, %v598
        %v600 = vpop.f32.mrf.mxu0
        %601 = vdwg.mxu0
        %v602 = vadd.f32 %v502, %v594
        %v603 = vadd.f32 %v507, %v599
        %v604 = vld [vmem:[%s4] sm:$0x1]
        %v606 = vlaneseq
        %v607 = vshrl.u32 %v606, 7
        %v608 = vsub.s32 0, %v607
        %v609 = vrot.slane %v604, %v608
        %v611 = vadd.f32 %v602, %v609
        %v612 = vadd.f32 %v603, %v609
        %v613 = vmax.f32 %v611, 0.0
        %v614 = vmax.f32 %v612, 0.0
        %615 = vst.msk [vmem:[#allocation2 + $0x1] sm:$0xff] %vm324, %v613
        %616 = vst.msk [vmem:[#allocation2 + $0x9] sm:$0xff] %vm324, %v614
        %v617 = vld [vmem:[#allocation2] sm:$0xff]
        %v618 = vld [vmem:[#allocation2 + $0x8] sm:$0xff]
        %v619 = vld [vmem:[#allocation8] sm:$0xff]
        %v620 = vld [vmem:[#allocation8 + $0x8] sm:$0xff]
        %v621 = vld [vmem:[#allocation8 + $0x10] sm:$0xff]
        %v622 = vld [vmem:[#allocation8 + $0x18] sm:$0xff]
        %v623 = vld [vmem:[#allocation8 + $0x20] sm:$0xff]
        %v624 = vld [vmem:[#allocation8 + $0x28] sm:$0xff]
        %v625 = vld [vmem:[#allocation8 + $0x30] sm:$0xff]
        %v626 = vld [vmem:[#allocation8 + $0x38] sm:$0xff]
        %v627 = vld [vmem:[#allocation2 + $0x1] sm:$0xff]
        %v628 = vld [vmem:[#allocation2 + $0x9] sm:$0xff]
        %s629 = scalar_lea.vmem [#allocation8], 64
        %v630 = vld [vmem:[%s629] sm:$0xff]
        %v631 = vld [vmem:[%s629 + $0x8] sm:$0xff]
        %v632 = vld [vmem:[%s629 + $0x10] sm:$0xff]
        %v633 = vld [vmem:[%s629 + $0x18] sm:$0xff]
        %v634 = vld [vmem:[%s629 + $0x20] sm:$0xff]
        %v635 = vld [vmem:[%s629 + $0x28] sm:$0xff]
        %v636 = vld [vmem:[%s629 + $0x30] sm:$0xff]
        %v637 = vld [vmem:[%s629 + $0x38] sm:$0xff]
        %v639 = vsel %vm324, %v627, 0
        %v642 = vsel %vm324, %v628, 0
        %644 = vmatprep.subr.mxu0 0.0
        %645 = vmatpush1.msra.mxu0 0.0
        %646 = vmatprep.subr.mxu0 0.0
        %647 = vmatpush1.msra.mxu0 0.0
        %648 = vmatprep.subr.mxu0 0.0
        %649 = vmatpush1.msra.mxu0 0.0
        %650 = vmatprep.subr.mxu0 0.0
        %651 = vmatpush1.msra.mxu0 0.0
        %652 = vmatprep.subr.mxu0 0.0
        %653 = vmatpush1.msra.mxu0 0.0
        %654 = vmatprep.subr.mxu0 0.0
        %655 = vmatpush1.msra.mxu0 0.0
        %656 = vmatprep.subr.mxu0 0.0
        %657 = vmatpush1.msra.mxu0 0.0
        %658 = vmatprep.subr.mxu0 0.0
        %659 = vmatpush1.msra.mxu0 0.0
        %660 = vmatprep.subr.mxu0 0.0
        %661 = vmatpush1.msra.mxu0 %v637
        %662 = vmatprep.subr.mxu0 0.0
        %663 = vmatpush1.msra.mxu0 %v636
        %664 = vmatprep.subr.mxu0 0.0
        %665 = vmatpush1.msra.mxu0 %v635
        %666 = vmatprep.subr.mxu0 0.0
        %667 = vmatpush1.msra.mxu0 %v634
        %668 = vmatprep.subr.mxu0 0.0
        %669 = vmatpush1.msra.mxu0 %v633
        %670 = vmatprep.subr.mxu0 0.0
        %671 = vmatpush1.msra.mxu0 %v632
        %672 = vmatprep.subr.mxu0 0.0
        %673 = vmatpush1.msra.mxu0 %v631
        %674 = vmatprep.subr.mxu0 0.0
        %675 = vmatpush1.msra.mxu0 %v630
        %676 = vmatprep.subr.mxu0 0.0
        %677 = vmatpush2.msra.mxu0 0.0
        %678 = vmatprep.subr.mxu0 0.0
        %679 = vmatpush2.msra.mxu0 0.0
        %680 = vmatprep.subr.mxu0 0.0
        %681 = vmatpush2.msra.mxu0 0.0
        %682 = vmatprep.subr.mxu0 0.0
        %683 = vmatpush2.msra.mxu0 0.0
        %684 = vmatprep.subr.mxu0 0.0
        %685 = vmatpush2.msra.mxu0 0.0
        %686 = vmatprep.subr.mxu0 0.0
        %687 = vmatpush2.msra.mxu0 0.0
        %688 = vmatprep.subr.mxu0 0.0
        %689 = vmatpush2.msra.mxu0 0.0
        %690 = vmatprep.subr.mxu0 0.0
        %691 = vmatpush2.msra.mxu0 0.0
        %692 = vmatprep.subr.mxu0 0.0
        %693 = vmatpush2.msra.mxu0 0.0
        %694 = vmatprep.subr.mxu0 0.0
        %695 = vmatpush2.msra.mxu0 0.0
        %696 = vmatprep.subr.mxu0 0.0
        %697 = vmatpush2.msra.mxu0 0.0
        %698 = vmatprep.subr.mxu0 0.0
        %699 = vmatpush2.msra.mxu0 0.0
        %700 = vmatprep.subr.mxu0 0.0
        %701 = vmatpush2.msra.mxu0 0.0
        %702 = vmatprep.subr.mxu0 0.0
        %703 = vmatpush2.msra.mxu0 0.0
        %704 = vmatprep.subr.mxu0 0.0
        %705 = vmatpush2.msra.mxu0 0.0
        %706 = vmatprep.subr.mxu0 0.0
        %707 = vmatpush2.msra.mxu0 0.0
        %708 = vmatprep.mubr.f32.mxu0 0.0
        %709 = vmatmul.mubr.f32.gmra.mxu0 %v639
        %v710 = vpop.f32.mrf.mxu0
        %v711 = vadd.f32 0.0, %v710
        %v712 = vpop.f32.mrf.mxu0
        %713 = vmatprep.mubr.f32.mxu0 0.0
        %714 = vmatmul.mubr.f32.gmra.mxu0 %v642
        %v715 = vpop.f32.mrf.mxu0
        %v716 = vadd.f32 0.0, %v715
        %v717 = vpop.f32.mrf.mxu0
        %718 = vdwg.mxu0
        %v720 = vsel %vm324, %v617, 0
        %v723 = vsel %vm324, %v618, 0
        %725 = vmatprep.subr.mxu0 0.0
        %726 = vmatpush1.msra.mxu0 0.0
        %727 = vmatprep.subr.mxu0 0.0
        %728 = vmatpush1.msra.mxu0 0.0
        %729 = vmatprep.subr.mxu0 0.0
        %730 = vmatpush1.msra.mxu0 0.0
        %731 = vmatprep.subr.mxu0 0.0
        %732 = vmatpush1.msra.mxu0 0.0
        %733 = vmatprep.subr.mxu0 0.0
        %734 = vmatpush1.msra.mxu0 0.0
        %735 = vmatprep.subr.mxu0 0.0
        %736 = vmatpush1.msra.mxu0 0.0
        %737 = vmatprep.subr.mxu0 0.0
        %738 = vmatpush1.msra.mxu0 0.0
        %739 = vmatprep.subr.mxu0 0.0
        %740 = vmatpush1.msra.mxu0 0.0
        %741 = vmatprep.subr.mxu0 0.0
        %742 = vmatpush1.msra.mxu0 %v626
        %743 = vmatprep.subr.mxu0 0.0
        %744 = vmatpush1.msra.mxu0 %v625
        %745 = vmatprep.subr.mxu0 0.0
        %746 = vmatpush1.msra.mxu0 %v624
        %747 = vmatprep.subr.mxu0 0.0
        %748 = vmatpush1.msra.mxu0 %v623
        %749 = vmatprep.subr.mxu0 0.0
        %750 = vmatpush1.msra.mxu0 %v622
        %751 = vmatprep.subr.mxu0 0.0
        %752 = vmatpush1.msra.mxu0 %v621
        %753 = vmatprep.subr.mxu0 0.0
        %754 = vmatpush1.msra.mxu0 %v620
        %755 = vmatprep.subr.mxu0 0.0
        %756 = vmatpush1.msra.mxu0 %v619
        %757 = vmatprep.subr.mxu0 0.0
        %758 = vmatpush2.msra.mxu0 0.0
        %759 = vmatprep.subr.mxu0 0.0
        %760 = vmatpush2.msra.mxu0 0.0
        %761 = vmatprep.subr.mxu0 0.0
        %762 = vmatpush2.msra.mxu0 0.0
        %763 = vmatprep.subr.mxu0 0.0
        %764 = vmatpush2.msra.mxu0 0.0
        %765 = vmatprep.subr.mxu0 0.0
        %766 = vmatpush2.msra.mxu0 0.0
        %767 = vmatprep.subr.mxu0 0.0
        %768 = vmatpush2.msra.mxu0 0.0
        %769 = vmatprep.subr.mxu0 0.0
        %770 = vmatpush2.msra.mxu0 0.0
        %771 = vmatprep.subr.mxu0 0.0
        %772 = vmatpush2.msra.mxu0 0.0
        %773 = vmatprep.subr.mxu0 0.0
        %774 = vmatpush2.msra.mxu0 0.0
        %775 = vmatprep.subr.mxu0 0.0
        %776 = vmatpush2.msra.mxu0 0.0
        %777 = vmatprep.subr.mxu0 0.0
        %778 = vmatpush2.msra.mxu0 0.0
        %779 = vmatprep.subr.mxu0 0.0
        %780 = vmatpush2.msra.mxu0 0.0
        %781 = vmatprep.subr.mxu0 0.0
        %782 = vmatpush2.msra.mxu0 0.0
        %783 = vmatprep.subr.mxu0 0.0
        %784 = vmatpush2.msra.mxu0 0.0
        %785 = vmatprep.subr.mxu0 0.0
        %786 = vmatpush2.msra.mxu0 0.0
        %787 = vmatprep.subr.mxu0 0.0
        %788 = vmatpush2.msra.mxu0 0.0
        %789 = vmatprep.mubr.f32.mxu0 0.0
        %790 = vmatmul.mubr.f32.gmra.mxu0 %v720
        %v791 = vpop.f32.mrf.mxu0
        %v792 = vadd.f32 %v711, %v791
        %v793 = vpop.f32.mrf.mxu0
        %794 = vmatprep.mubr.f32.mxu0 0.0
        %795 = vmatmul.mubr.f32.gmra.mxu0 %v723
        %v796 = vpop.f32.mrf.mxu0
        %v797 = vadd.f32 %v716, %v796
        %v798 = vpop.f32.mrf.mxu0
        %799 = vdwg.mxu0
        %v800 = vld [vmem:[#allocation2 + $0x2] sm:$0xff]
        %v801 = vld [vmem:[#allocation2 + $0xa] sm:$0xff]
        %s802 = scalar_lea.vmem [#allocation8], 128
        %v803 = vld [vmem:[%s802] sm:$0xff]
        %v804 = vld [vmem:[%s802 + $0x8] sm:$0xff]
        %v805 = vld [vmem:[%s802 + $0x10] sm:$0xff]
        %v806 = vld [vmem:[%s802 + $0x18] sm:$0xff]
        %v807 = vld [vmem:[%s802 + $0x20] sm:$0xff]
        %v808 = vld [vmem:[%s802 + $0x28] sm:$0xff]
        %v809 = vld [vmem:[%s802 + $0x30] sm:$0xff]
        %v810 = vld [vmem:[%s802 + $0x38] sm:$0xff]
        %v812 = vsel %vm324, %v800, 0
        %v815 = vsel %vm324, %v801, 0
        %817 = vmatprep.subr.mxu0 0.0
        %818 = vmatpush1.msra.mxu0 0.0
        %819 = vmatprep.subr.mxu0 0.0
        %820 = vmatpush1.msra.mxu0 0.0
        %821 = vmatprep.subr.mxu0 0.0
        %822 = vmatpush1.msra.mxu0 0.0
        %823 = vmatprep.subr.mxu0 0.0
        %824 = vmatpush1.msra.mxu0 0.0
        %825 = vmatprep.subr.mxu0 0.0
        %826 = vmatpush1.msra.mxu0 0.0
        %827 = vmatprep.subr.mxu0 0.0
        %828 = vmatpush1.msra.mxu0 0.0
        %829 = vmatprep.subr.mxu0 0.0
        %830 = vmatpush1.msra.mxu0 0.0
        %831 = vmatprep.subr.mxu0 0.0
        %832 = vmatpush1.msra.mxu0 0.0
        %833 = vmatprep.subr.mxu0 0.0
        %834 = vmatpush1.msra.mxu0 %v810
        %835 = vmatprep.subr.mxu0 0.0
        %836 = vmatpush1.msra.mxu0 %v809
        %837 = vmatprep.subr.mxu0 0.0
        %838 = vmatpush1.msra.mxu0 %v808
        %839 = vmatprep.subr.mxu0 0.0
        %840 = vmatpush1.msra.mxu0 %v807
        %841 = vmatprep.subr.mxu0 0.0
        %842 = vmatpush1.msra.mxu0 %v806
        %843 = vmatprep.subr.mxu0 0.0
        %844 = vmatpush1.msra.mxu0 %v805
        %845 = vmatprep.subr.mxu0 0.0
        %846 = vmatpush1.msra.mxu0 %v804
        %847 = vmatprep.subr.mxu0 0.0
        %848 = vmatpush1.msra.mxu0 %v803
        %849 = vmatprep.subr.mxu0 0.0
        %850 = vmatpush2.msra.mxu0 0.0
        %851 = vmatprep.subr.mxu0 0.0
        %852 = vmatpush2.msra.mxu0 0.0
        %853 = vmatprep.subr.mxu0 0.0
        %854 = vmatpush2.msra.mxu0 0.0
        %855 = vmatprep.subr.mxu0 0.0
        %856 = vmatpush2.msra.mxu0 0.0
        %857 = vmatprep.subr.mxu0 0.0
        %858 = vmatpush2.msra.mxu0 0.0
        %859 = vmatprep.subr.mxu0 0.0
        %860 = vmatpush2.msra.mxu0 0.0
        %861 = vmatprep.subr.mxu0 0.0
        %862 = vmatpush2.msra.mxu0 0.0
        %863 = vmatprep.subr.mxu0 0.0
        %864 = vmatpush2.msra.mxu0 0.0
        %865 = vmatprep.subr.mxu0 0.0
        %866 = vmatpush2.msra.mxu0 0.0
        %867 = vmatprep.subr.mxu0 0.0
        %868 = vmatpush2.msra.mxu0 0.0
        %869 = vmatprep.subr.mxu0 0.0
        %870 = vmatpush2.msra.mxu0 0.0
        %871 = vmatprep.subr.mxu0 0.0
        %872 = vmatpush2.msra.mxu0 0.0
        %873 = vmatprep.subr.mxu0 0.0
        %874 = vmatpush2.msra.mxu0 0.0
        %875 = vmatprep.subr.mxu0 0.0
        %876 = vmatpush2.msra.mxu0 0.0
        %877 = vmatprep.subr.mxu0 0.0
        %878 = vmatpush2.msra.mxu0 0.0
        %879 = vmatprep.subr.mxu0 0.0
        %880 = vmatpush2.msra.mxu0 0.0
        %881 = vmatprep.mubr.f32.mxu0 0.0
        %882 = vmatmul.mubr.f32.gmra.mxu0 %v812
        %v883 = vpop.f32.mrf.mxu0
        %v884 = vadd.f32 0.0, %v883
        %v885 = vpop.f32.mrf.mxu0
        %886 = vmatprep.mubr.f32.mxu0 0.0
        %887 = vmatmul.mubr.f32.gmra.mxu0 %v815
        %v888 = vpop.f32.mrf.mxu0
        %v889 = vadd.f32 0.0, %v888
        %v890 = vpop.f32.mrf.mxu0
        %891 = vdwg.mxu0
        %v892 = vadd.f32 %v792, %v884
        %v893 = vadd.f32 %v797, %v889
        %v894 = vld [vmem:[%s262] sm:$0xff]
        %v895 = vld [vmem:[%s262 + $0x8] sm:$0xff]
        %v896 = vadd.f32 %v892, %v894
        %v897 = vadd.f32 %v893, %v895
        %898 = vst.msk [vmem:[%s298] sm:$0xff] %vm324, %v896
        %899 = vst.msk [vmem:[%s298 + $0x8] sm:$0xff] %vm324, %v897
        %s900 = sand.u32 %s163, 1
        %s901 = scalar_lea.sflag [#allocation5], %s900
        %s902 = sand.u32 %s163, 1
        %s903 = smul.addr %s902, 16
        %s904 = scalar_lea.vmem [#allocation9], %s903
        // Predicated region
        $region57: #{tpu_custom_call.1} parent=43 // pred_check
          %p905 = pneg %p173
        $region58: #{tpu_custom_call.1} parent=43 // pred_check_branch
          %907 = sbr.rel (%p905) target = $region60
        $region59: #{tpu_custom_call.1} parent=43 // pred_region
          %s909 = ssub.s32 256, 256
          %910 = vsyncadd %s901, %s909
          %s911 = smul.addr %s24, 2
          %s912 = smul.addr %s911, 128
          %s913 = scalar_lea.hbm %s6, %s912
          %s914 = sshll.u32 %s904, 4
          %s915 = int_to_ptr.vmem [resolvable:$true] %s914
          %920 = dma.vmem_to_hbm [thread:$0]  %s915, 256, %s913, %s901, 128, 128, 8
        $region60: #{tpu_custom_call.1} parent=43 // pred_fallthru
          _
      $region44: #{tpu_custom_call.1} parent=5 // pred_fallthru
        _
      %p921 = scmp.le.s32.totalorder 2, %s19
      // Predicated region
      $region61: #{tpu_custom_call.1} parent=5 // pred_check
        %p922 = pneg %p921
      $region62: #{tpu_custom_call.1} parent=5 // pred_check_branch
        %924 = sbr.rel (%p922) target = $region64
      $region63: #{tpu_custom_call.1} parent=5 // pred_region
        %s925 = ssub.s32 %s19, 2
        // Predicated region
        $region65: #{tpu_custom_call.1} parent=63 // pred_check
          %p926 = pneg %p179
        $region66: #{tpu_custom_call.1} parent=63 // pred_check_branch
          %928 = sbr.rel (%p926) target = $region68
        $region67: #{tpu_custom_call.1} parent=63 // pred_region
          %s929 = sand.u32 %s164, 1
          %s930 = scalar_lea.sflag [#allocation5], %s929
          %s931 = sand.u32 %s164, 1
          %s932 = smul.addr %s931, 16
          %s933 = scalar_lea.vmem [#allocation9], %s932
          %934 = dma.done %s930, 256
        $region68: #{tpu_custom_call.1} parent=63 // pred_fallthru
          _
      $region64: #{tpu_custom_call.1} parent=5 // pred_fallthru
        _
    $region6: #{tpu_custom_call.1} parent=1 // loop_footer
      %s23 = sadd.s32 1, %s19
    $region7: #{tpu_custom_call.1} parent=1 // loop_footer_branch
      %18 = sbr.rel target = $region3
    $region8: #{tpu_custom_call.1} parent=1 // loop_exit
      _
    %935 = vsyncpa [#allocation4], 1
    %s936 = scalar_lea.sflag [#allocation4], 1
    %937 = vsyncpa %s936, 1
    %938 = vsyncpa [#allocation7], 1
    %939 = vsyncpa [#allocation5], 1
    %s940 = scalar_lea.sflag [#allocation5], 1
    %941 = vsyncpa %s940, 1

</llo_original>
